<compile_context>
chip_gen: v7x
topology: tpu7x:2x2x1
jax: 0.10.0
libtpu: 0.0.40
codegen_flags: <defaults>
</compile_context>

<pallas_src>
import numpy as np
import jax
import jax.numpy as jnp
from jax import lax
from jax.experimental import pallas as pl
from jax.experimental.pallas import tpu as pltpu


# -----------------------------------------------------------------------------
# Kernel 0: hoisted, i-independent time-weight GEMM   XT = x2 @ concat(tw)
# -----------------------------------------------------------------------------
def _xt_kernel(x_ref, twc_ref, o_ref):
    o_ref[...] = jnp.dot(x_ref[...], twc_ref[...],
                         preferred_element_type=jnp.float32)


def xt_pallas(x2, tw_cat):
    BS = x2.shape[0]
    N = tw_cat.shape[1]
    return pl.pallas_call(
        _xt_kernel,
        out_shape=jax.ShapeDtypeStruct((BS, N), jnp.float32),
    )(x2, tw_cat)


# -----------------------------------------------------------------------------
# Kernel A: per-step candidate x_cand (parallel over the sequence axis)
# -----------------------------------------------------------------------------
def xcand_pallas(xt, dw_cat, sel, comb_sm, *, ns1, inter, hid):
    """xt: (B*S, ns1*inter); dw_cat: (inter, ns1*hid); sel: (B, B*S);
    comb_sm: (S, B*S, 3) = [mask, t_slot, d_slot] step-major.  Returns (S, B, hid)."""
    S, BS, _ = comb_sm.shape
    B = sel.shape[0]
    NW = xt.shape[1]

    def kernel(xt_ref, dwc_ref, sel_ref, comb_ref, xc_ref):
        comb = comb_ref[0]                       # (BS, 3)
        mask = comb[:, 0:1]                      # (BS, 1) causal+context mask (f32)
        ts = comb[:, 1:2]                        # time-slot index (as f32)
        ds = comb[:, 2:3]                        # dist-slot index (as f32)
        xt_v = xt_ref[...]                       # (BS, ns1*inter)

        # w1[bc,:] = mask * (x[bc] @ tw[t_slot[bc]])  -- pure VPU select/accumulate
        w1 = jnp.zeros((BS, inter), jnp.float32)
        for s in range(ns1):                     # ns1 is tiny -> unrolled
            w1 = w1 + jnp.where(ts == float(s), mask, 0.0) \
                * xt_v[:, s * inter:(s + 1) * inter]

        # one wide GEMM against concatenated dist weights, then VPU select over ns1
        vcat = jnp.dot(w1, dwc_ref[...], preferred_element_type=jnp.float32)
        v = jnp.zeros((BS, hid), jnp.float32)
        for r in range(ns1):
            v = v + jnp.where(ds == float(r), 1.0, 0.0) \
                * vcat[:, r * hid:(r + 1) * hid]

        # sum over context positions via selector matmul (avoids reshape + sublane
        # reduction; mask already folded into w1, including c<=i causality)
        xc = jnp.dot(sel_ref[...], v, preferred_element_type=jnp.float32)   # (B, hid)
        xc_ref[...] = xc[None].astype(xc_ref.dtype)

    return pl.pallas_call(
        kernel,
        out_shape=jax.ShapeDtypeStruct((S, B, hid), jnp.float32),
        grid_spec=pltpu.PrefetchScalarGridSpec(
            num_scalar_prefetch=0,
            grid=(S,),
            in_specs=[
                pl.BlockSpec((BS, NW), lambda i: (0, 0)),          # XT, resident
                pl.BlockSpec((inter, ns1 * hid), lambda i: (0, 0)),
                pl.BlockSpec((B, BS), lambda i: (0, 0)),
                pl.BlockSpec((1, BS, 3), lambda i: (i, 0, 0)),     # per-step scalars
            ],
            out_specs=pl.BlockSpec((1, B, hid), lambda i: (i, 0, 0)),
        ),
        compiler_params=pltpu.CompilerParams(
            dimension_semantics=("parallel",)),    # no h-dependence -> shardable
    )(xt, dw_cat, sel, comb_sm)


# -----------------------------------------------------------------------------
# Kernel B: serial recurrence + rnn_out_pre gather + output MLP (fused epilogue)
# -----------------------------------------------------------------------------
def recurrence_mlp_pallas(xc, hw, w1, b1, w2, b2, gather_idx):
    """xc: (S, B, hid).  gather_idx: static tuple of (step, batch) pairs for the
    rnn_out_pre rows.  Returns (len(gather_idx), output_size)."""
    S, B, Hid = xc.shape
    n_rows = len(gather_idx)
    out_size = w2.shape[1]

    def kernel(xc_ref, hw_ref, w1_ref, b1_ref, w2_ref, b2_ref, o_ref):
        h = jnp.zeros((B, Hid), jnp.float32)
        hs = []
        # S is small & static -> fully unrolled serial recurrence (only thing that
        # must stay sequential; everything else already computed in kernel A).
        for i in range(S):
            h = jax.nn.sigmoid(
                xc_ref[i] + jnp.dot(h, hw_ref[...],
                                    preferred_element_type=jnp.float32))
            hs.append(h)

        # rnn_out_pre gather: indices are static (valid_len is host-side)
        pre = jnp.concatenate([hs[gi][gb:gb + 1, :] for (gi, gb) in gather_idx],
                              axis=0)                               # (n_rows, Hid)

        # TODO(synk): nn.Dropout(0.1) is identity at inference time; not modeled.
        hm = jnp.tanh(jnp.dot(pre, w1_ref[...],
                              preferred_element_type=jnp.float32) + b1_ref[...])
        o_ref[...] = (jnp.dot(hm, w2_ref[...],
                              preferred_element_type=jnp.float32)
                      + b2_ref[...]).astype(o_ref.dtype)

    return pl.pallas_call(
        kernel,
        out_shape=jax.ShapeDtypeStruct((n_rows, out_size), jnp.float32),
    )(xc, hw, w1, b1.reshape(1, -1), w2, b2.reshape(1, -1))


# -----------------------------------------------------------------------------
# Parameter initialization (deterministic, synthetic)
# -----------------------------------------------------------------------------
def make_params(key, vocab, input_size, hidden_size, inter_size, num_slots,
                output_size):
    ns1 = num_slots + 1
    ks = jax.random.split(key, 8)

    def xavier(k, shape, fan_in, fan_out):
        std = float(np.sqrt(2.0 / (fan_in + fan_out)))
        return std * jax.random.normal(k, shape, jnp.float32)

    return {
        "embed": 0.1 * jax.random.normal(ks[0], (vocab, input_size), jnp.float32),
        "enc_time_w": xavier(ks[1], (ns1, input_size, inter_size),
                             input_size, inter_size),
        "enc_dist_w": xavier(ks[2], (ns1, inter_size, hidden_size),
                             inter_size, hidden_size),
        "enc_hidden_w": xavier(ks[3], (hidden_size, hidden_size),
                               hidden_size, hidden_size),
        "out_w1": xavier(ks[4], (hidden_size, hidden_size * 4),
                         hidden_size, hidden_size * 4),
        "out_b1": 0.01 * jax.random.normal(ks[5], (hidden_size * 4,), jnp.float32),
        "out_w2": xavier(ks[6], (hidden_size * 4, output_size),
                         hidden_size * 4, output_size),
        "out_b2": 0.01 * jax.random.normal(ks[7], (output_size,), jnp.float32),
    }
    # TODO(synk): the decoder STRNN in the PyTorch module is never used in
    # forward(); it is intentionally not instantiated here.


# -----------------------------------------------------------------------------
# Shared glue (sequence construction, masks, slot indices) — plain JAX / host
# -----------------------------------------------------------------------------
def build_strnn_inputs(params, full_seq, valid_len, pre_len, timestamp, lat,
                       lng, num_slots, time_window, dist_window):
    # TODO(synk): ragged sequence packing keyed on int(valid_len[i]) stays on the
    # host (same as the PyTorch list-comprehension); it retraces per length pattern.
    B, L = full_seq.shape
    input_size = params["embed"].shape[1]
    history_len = np.asarray(valid_len) - pre_len
    max_len = int(history_len.max())

    full_embed = params["embed"][full_seq]                          # (B, L, In)
    cat_input = jnp.concatenate(
        [full_embed, timestamp[..., None], lat[..., None], lng[..., None]],
        axis=-1)                                                    # (B, L, In+3)

    rows = []
    for i in range(B):
        s = int(history_len[i])
        rows.append(jnp.concatenate(
            [cat_input[i, :s],
             cat_input[i, -pre_len:],
             jnp.zeros((max_len - s, input_size + 3), jnp.float32)], axis=0))
    seq_inp = jnp.stack(rows, axis=0)                               # (B, S, In+3)
    S = seq_inp.shape[1]

    seq_ts = seq_inp[:, :, -3]
    time_delta = seq_ts[:, :, None] - seq_ts[:, None, :]            # (B, S, S)
    valid_pos = (jnp.asarray(valid_len)[:, None]
                 > jnp.arange(S)[None, :])                          # (B, S)
    context_mask = ((time_delta <= time_window) & (time_delta >= 0)
                    & valid_pos[:, None, :])                        # (B, S, S)

    seq_ll = seq_inp[:, :, -2:]
    dist = jnp.sqrt(((seq_ll[:, :, None, :]
                      - seq_ll[:, None, :, :]) ** 2).sum(-1))       # (B, S, S)

    t_slot = jnp.floor(jnp.clip(time_delta, 0, time_window)
                       / time_window * num_slots).astype(jnp.int32)
    d_slot = jnp.floor(jnp.clip(dist, 0, dist_window)
                       / dist_window * num_slots).astype(jnp.int32)

    x_in = seq_inp[:, :, :-3]                                       # (B, S, In)
    return x_in, t_slot, d_slot, context_mask, S


# -----------------------------------------------------------------------------
# Forward pass (Pallas path)
# -----------------------------------------------------------------------------
def strnn_loc_predictor_pallas(params, full_seq, valid_len, pre_len, timestamp,
                               lat, lng, num_slots, time_window, dist_window):
    B = full_seq.shape[0]
    x_in, t_slot, d_slot, context_mask, S = build_strnn_inputs(
        params, full_seq, valid_len, pre_len, timestamp, lat, lng,
        num_slots, time_window, dist_window)

    tw = params["enc_time_w"]
    dw = params["enc_dist_w"]
    hw = params["enc_hidden_w"]
    ns1 = tw.shape[0]
    In = x_in.shape[-1]
    inter = tw.shape[2]
    hid = hw.shape[0]

    # causal (c<=i, matches the PyTorch x[:, :i+1] slice) + context mask, folded
    causal = jnp.tril(jnp.ones((S, S), bool))
    full_mask = (context_mask & causal[None]).astype(jnp.float32)   # (B, S, S)

    # step-major packed per-step scalars: [mask, t_slot, d_slot] (in-kernel one-hot)
    comb = jnp.stack([full_mask,
                      t_slot.astype(jnp.float32),
                      d_slot.astype(jnp.float32)], axis=-1)          # (B, S, S, 3)
    comb_sm = jnp.transpose(comb, (1, 0, 2, 3)).reshape(S, B * S, 3)  # (S, B*S, 3)

    # lane-concatenated weights (fewer, wider MXU pushes)
    x2 = x_in.reshape(B * S, In)                                      # row b*S + c
    tw_cat = jnp.transpose(tw, (1, 0, 2)).reshape(In, ns1 * inter)    # (In, ns1*inter)
    dw_cat = jnp.transpose(dw, (1, 0, 2)).reshape(inter, ns1 * hid)   # (inter, ns1*hid)
    # context-sum selector: sel[b, b*S + c] = 1
    sel = (jnp.arange(B * S)[None, :] // S
           == jnp.arange(B)[:, None]).astype(jnp.float32)            # (B, B*S)

    # kernel 0: hoisted i-independent GEMM
    xt = xt_pallas(x2, tw_cat)                                        # (B*S, ns1*inter)
    # kernel A: all x_cand, parallel over steps
    xc = xcand_pallas(xt, dw_cat, sel, comb_sm,
                      ns1=ns1, inter=inter, hid=hid)                  # (S, B, hid)

    # kernel B: serial recurrence + static gather + MLP epilogue
    vl = np.asarray(valid_len)
    gather_idx = tuple((int(vl[b]) - pre_len - 1 + p, b)
                       for b in range(B) for p in range(pre_len))
    out = recurrence_mlp_pallas(xc, hw, params["out_w1"], params["out_b1"],
                                params["out_w2"], params["out_b2"], gather_idx)
    return out.reshape(B, pre_len, -1)


# -----------------------------------------------------------------------------
# Pure-JAX reference (mirrors the PyTorch code exactly) for validation
# -----------------------------------------------------------------------------
def strnn_loc_predictor_ref(params, full_seq, valid_len, pre_len, timestamp,
                            lat, lng, num_slots, time_window, dist_window):
    P = lax.Precision.HIGHEST
    B = full_seq.shape[0]
    x_in, t_slot, d_slot, context_mask, S = build_strnn_inputs(
        params, full_seq, valid_len, pre_len, timestamp, lat, lng,
        num_slots, time_window, dist_window)

    tw, dw, hw = (params["enc_time_w"], params["enc_dist_w"],
                  params["enc_hidden_w"])
    Hid = hw.shape[0]
    h = jnp.zeros((B, Hid), jnp.float32)
    outs = []
    for i in range(S):
        xc = x_in[:, :i + 1]
        t = t_slot[:, i, :i + 1]
        d = d_slot[:, i, :i + 1]
        m = context_mask[:, i, :i + 1]
        comb = jnp.matmul(tw[t], dw[d], precision=P)        # (B, c, In, H)
        xcand = jnp.matmul(xc[:, :, None, :], comb, precision=P)[:, :, 0, :]
        xcand = jnp.where(m[..., None], xcand, 0.0).sum(axis=1)
        h = jax.nn.sigmoid(xcand + jnp.matmul(h, hw, precision=P))
        outs.append(h)
    rnn_out = jnp.stack(outs, axis=1)                        # (B, S, H)

    pre_rows = []
    for i in range(B):
        v = int(valid_len[i])
        pre_rows.append(rnn_out[i, v - pre_len - 1: v - 1])
    rnn_out_pre = jnp.stack(pre_rows, axis=0)

    hmid = jnp.tanh(jnp.matmul(rnn_out_pre, params["out_w1"], precision=P)
                    + params["out_b1"])
    return jnp.matmul(hmid, params["out_w2"], precision=P) + params["out_b2"]


# -----------------------------------------------------------------------------
if __name__ == "__main__":
    # small, deterministic example shapes
    B, L, pre_len = 2, 12, 3
    vocab = 50
    input_size, hidden_size, inter_size = 16, 32, 16
    num_slots, output_size = 4, 8
    time_window, dist_window = 5.0, 3.0

    key = jax.random.PRNGKey(0)
    k_par, k_seq, k_ts, k_lat, k_lng = jax.random.split(key, 5)

    params = make_params(k_par, vocab, input_size, hidden_size, inter_size,
                         num_slots, output_size)

    full_seq = jax.random.randint(k_seq, (B, L), 0, vocab, dtype=jnp.int32)
    valid_len = np.array([10, 12], dtype=np.int32)           # history = valid - pre
    timestamp = (jnp.arange(L, dtype=jnp.float32)[None, :] * 1.5
                 + 0.4 * jax.random.uniform(k_ts, (B, L), jnp.float32))
    lat = jax.random.uniform(k_lat, (B, L), jnp.float32)
    lng = jax.random.uniform(k_lng, (B, L), jnp.float32)

    out_pallas = strnn_loc_predictor_pallas(
        params, full_seq, valid_len, pre_len, timestamp, lat, lng,
        num_slots, time_window, dist_window)
    out_pallas = jax.block_until_ready(out_pallas)

    out_ref = strnn_loc_predictor_ref(
        params, full_seq, valid_len, pre_len, timestamp, lat, lng,
        num_slots, time_window, dist_window)
    out_ref = jax.block_until_ready(out_ref)

    assert out_pallas.shape == (B, pre_len, output_size), out_pallas.shape
    np.testing.assert_allclose(np.asarray(out_pallas), np.asarray(out_ref),
                               rtol=2e-3, atol=2e-3)
    print("KERNEL_OK")
</pallas_src>

<mosaic_0001>
module attributes {stable_mosaic.version = 11 : i64} {
  func.func @_xt_kernel(%arg0: memref<24x16xf32, #tpu.memory_space<vmem>>, %arg1: memref<16x80xf32, #tpu.memory_space<vmem>>, %arg2: memref<24x80xf32, #tpu.memory_space<vmem>>) attributes {dimension_semantics = [], scalar_prefetch = 0 : i64, scratch_operands = 0 : i64, tpu.core_type = #tpu.core_type<tc>} {
    %c0 = arith.constant 0 : index
    %c0_0 = arith.constant 0 : index
    %0 = vector.load %arg0[%c0, %c0_0] : memref<24x16xf32, #tpu.memory_space<vmem>>, vector<24x16xf32>
    %c0_1 = arith.constant 0 : index
    %c0_2 = arith.constant 0 : index
    %1 = vector.load %arg1[%c0_1, %c0_2] : memref<16x80xf32, #tpu.memory_space<vmem>>, vector<16x80xf32>
    %cst = arith.constant dense<0.000000e+00> : vector<24x80xf32>
    %2 = tpu.matmul %0, %1, %cst {dimension_numbers = #tpu.dot_dimension_numbers<[1], [0], [0], [1], [0, 0, 1, 1], [], []>} : vector<24x16xf32>, vector<16x80xf32>, vector<24x80xf32> -> vector<24x80xf32>
    %c0_3 = arith.constant 0 : index
    %c0_4 = arith.constant 0 : index
    %3 = vector.load %arg2[%c0_3, %c0_4] : memref<24x80xf32, #tpu.memory_space<vmem>>, vector<24x80xf32>
    tpu.vector_store %arg2[%c0_3, %c0_4], %2 {strides = array<i32>} : memref<24x80xf32, #tpu.memory_space<vmem>>, vector<24x80xf32>,
    return
  }
}

</mosaic_0001>

<llo_original>
// kernel: tpu_custom_call.1
$region0: #{tpu_custom_call.1}
  #allocation0 [shape = 'u32[]', space=smem, size = 0x4, offset = 0x4, fixed_abs, tag = 'smem constant byte address 0x4 - core index']
  #allocation1 [shape = 'u32[144,128]{1,0:T(1,128)}', space=vmem, size = 0x12000, scoped, tag = 'internal scratch']
  %s0 = inlined_call_operand.vmem [shape: f32[24,16], index: 0, kind: input, shape index: {}]
  %s1 = inlined_call_operand.vmem [shape: f32[16,80], index: 1, kind: input, shape index: {}]
  %s2 = inlined_call_operand.hbm [shape: f32[24,80], index: 2, kind: output, shape index: {}]
  %s3 = sld [smem:[#allocation0]]
  $region18: #{tpu_custom_call.1} parent=0
    _
  %s5 = ssub.s32 1, %s3
  %s6 = scalar_select 0, %s5, %s3
  $region1: #{tpu_custom_call.1} parent=0
    #allocation2 [shape = 'u8[12288]{0}', space=vmem, size = 0x3000, scoped, tag = 'output window, operand 0, single buffered']
    #allocation3 [shape = 's32[1]{0}', space=sflag, size = 0x4, scoped, tag = 'scoped memory for tpu_custom_call.1']
    %7 = vsyncpa [#allocation3], 0
    // Predicated region
    $region2: #{tpu_custom_call.1} parent=1 // pred_check
      _
    $region3: #{tpu_custom_call.1} parent=1 // pred_check_branch
      %9 = sbr.rel (0) target = $region5
    $region4: #{tpu_custom_call.1} parent=1 // pred_region
      _
    $region5: #{tpu_custom_call.1} parent=1 // pred_fallthru
      _
    // Predicated region
    $region6: #{tpu_custom_call.1} parent=1 // pred_check
      _
    $region7: #{tpu_custom_call.1} parent=1 // pred_check_branch
      %11 = sbr.rel (0) target = $region9
    $region8: #{tpu_custom_call.1} parent=1 // pred_region
      _
    $region9: #{tpu_custom_call.1} parent=1 // pred_fallthru
      _
    %v12 = vld [vmem:[%s0] sm:$0xff]
    %v13 = vld [vmem:[%s0 + $0x8] sm:$0xff]
    %v14 = vld [vmem:[%s0 + $0x10] sm:$0xff]
    %v15 = vld [vmem:[%s1] sm:$0xff]
    %v16 = vld [vmem:[%s1 + $0x8] sm:$0xff]
    %vm17 = vcmask 130048
    %v19 = vsel %vm17, %v12, 0
    %v22 = vsel %vm17, %v13, 0
    %v25 = vsel %vm17, %v14, 0
    %27 = vmatprep.subr.mxu0 0.0
    %28 = vmatpush1.msra.mxu0 %v15
    %29 = vmatprep.subr.mxu0 0.0
    %30 = vmatpush1.msra.mxu0 %v16
    %31 = vmatprep.subr.mxu0 0.0
    %32 = vmatpush1.msra.mxu0 0.0
    %33 = vmatprep.subr.mxu0 0.0
    %34 = vmatpush1.msra.mxu0 0.0
    %35 = vmatprep.subr.mxu0 0.0
    %36 = vmatpush1.msra.mxu0 0.0
    %37 = vmatprep.subr.mxu0 0.0
    %38 = vmatpush1.msra.mxu0 0.0
    %39 = vmatprep.subr.mxu0 0.0
    %40 = vmatpush1.msra.mxu0 0.0
    %41 = vmatprep.subr.mxu0 0.0
    %42 = vmatpush1.msra.mxu0 0.0
    %43 = vmatprep.subr.mxu0 0.0
    %44 = vmatpush1.msra.mxu0 0.0
    %45 = vmatprep.subr.mxu0 0.0
    %46 = vmatpush1.msra.mxu0 0.0
    %47 = vmatprep.subr.mxu0 0.0
    %48 = vmatpush1.msra.mxu0 0.0
    %49 = vmatprep.subr.mxu0 0.0
    %50 = vmatpush1.msra.mxu0 0.0
    %51 = vmatprep.subr.mxu0 0.0
    %52 = vmatpush1.msra.mxu0 0.0
    %53 = vmatprep.subr.mxu0 0.0
    %54 = vmatpush1.msra.mxu0 0.0
    %55 = vmatprep.subr.mxu0 0.0
    %56 = vmatpush1.msra.mxu0 0.0
    %57 = vmatprep.subr.mxu0 0.0
    %58 = vmatpush1.msra.mxu0 0.0
    %59 = vmatprep.subr.mxu0 0.0
    %60 = vmatpush1.msra.mxu0 0.0
    %61 = vmatprep.subr.mxu0 0.0
    %62 = vmatpush1.msra.mxu0 0.0
    %63 = vmatprep.subr.mxu0 0.0
    %64 = vmatpush1.msra.mxu0 0.0
    %65 = vmatprep.subr.mxu0 0.0
    %66 = vmatpush1.msra.mxu0 0.0
    %67 = vmatprep.subr.mxu0 0.0
    %68 = vmatpush1.msra.mxu0 0.0
    %69 = vmatprep.subr.mxu0 0.0
    %70 = vmatpush1.msra.mxu0 0.0
    %71 = vmatprep.subr.mxu0 0.0
    %72 = vmatpush1.msra.mxu0 0.0
    %73 = vmatprep.subr.mxu0 0.0
    %74 = vmatpush1.msra.mxu0 0.0
    %75 = vmatprep.subr.mxu0 0.0
    %76 = vmatpush1.msra.mxu0 0.0
    %77 = vmatprep.subr.mxu0 0.0
    %78 = vmatpush1.msra.mxu0 0.0
    %79 = vmatprep.subr.mxu0 0.0
    %80 = vmatpush1.msra.mxu0 0.0
    %81 = vmatprep.subr.mxu0 0.0
    %82 = vmatpush1.msra.mxu0 0.0
    %83 = vmatprep.subr.mxu0 0.0
    %84 = vmatpush1.msra.mxu0 0.0
    %85 = vmatprep.subr.mxu0 0.0
    %86 = vmatpush1.msra.mxu0 0.0
    %87 = vmatprep.subr.mxu0 0.0
    %88 = vmatpush1.msra.mxu0 0.0
    %89 = vmatprep.subr.mxu0 0.0
    %90 = vmatpush1.msra.mxu0 0.0
    %91 = vmatprep.mubr.f32.mxu0 0.0
    %92 = vmatmul.mubr.f32.gmra.mrb[0].mxu0 %v19
    %v93 = vpop.f32.mrb[0].mxu0
    %v94 = vadd.f32 0.0, %v93
    %v95 = vpop.f32.mrb[0].mxu0
    %96 = vmatprep.mubr.f32.mxu0 0.0
    %97 = vmatmul.mubr.f32.gmra.mrb[0].mxu0 %v22
    %v98 = vpop.f32.mrb[0].mxu0
    %v99 = vadd.f32 0.0, %v98
    %v100 = vpop.f32.mrb[0].mxu0
    %101 = vmatprep.mubr.f32.mxu0 0.0
    %102 = vmatmul.mubr.f32.gmra.mrb[0].mxu0 %v25
    %v103 = vpop.f32.mrb[0].mxu0
    %v104 = vadd.f32 0.0, %v103
    %v105 = vpop.f32.mrb[0].mxu0
    %106 = vdwg.mxu0
    %vm107 = vcmask 654336
    %108 = vst.msk [vmem:[#allocation2] sm:$0xff] %vm107, %v94
    %109 = vst.msk [vmem:[#allocation2 + $0x8] sm:$0xff] %vm107, %v99
    %110 = vst.msk [vmem:[#allocation2 + $0x10] sm:$0xff] %vm107, %v104
    // Predicated region
    $region10: #{tpu_custom_call.1} parent=1 // pred_check
      _
    $region11: #{tpu_custom_call.1} parent=1 // pred_check_branch
      %112 = sbr.rel (0) target = $region13
    $region12: #{tpu_custom_call.1} parent=1 // pred_region
      %s114 = ssub.s32 384, 384
      %115 = vsyncadd [#allocation3], %s114
      %s116 = sshll.u32 [#allocation2], 4
      %s117 = int_to_ptr.vmem [resolvable:$true] %s116
      %122 = dma.vmem_to_hbm [thread:$0]  %s117, 384, %s2, [#allocation3], 128, 128, 8
    $region13: #{tpu_custom_call.1} parent=1 // pred_fallthru
      _
    // Predicated region
    $region14: #{tpu_custom_call.1} parent=1 // pred_check
      _
    $region15: #{tpu_custom_call.1} parent=1 // pred_check_branch
      %124 = sbr.rel (0) target = $region17
    $region16: #{tpu_custom_call.1} parent=1 // pred_region
      %125 = dma.done [#allocation3], 384
    $region17: #{tpu_custom_call.1} parent=1 // pred_fallthru
      _
    %126 = vsyncpa [#allocation3], 1

</llo_original>
